<compile_context>
chip_gen: v7x
topology: tpu7x:2x2x1
jax: 0.10.0
libtpu: 0.0.40
codegen_flags: <defaults>
</compile_context>

<pallas_src>
import math

import jax
import jax.numpy as jnp
from jax.experimental import pallas as pl
from jax.experimental.pallas import tpu as pltpu


def _round_up(x: int, m: int) -> int:
    return (x + m - 1) // m * m


def _mvp_cls_head_kernel(x_ref, w1_ref, b1_ref, w2_ref, b2_ref, o_ref):
    # x:(TM, D_in) input dtype, w1:(D_in, D_inner) bf16, b1:(1, D_inner) epi dtype
    # w2:(D_inner, C_pad) bf16, b2:(1, C_pad) f32, o:(TM, C_pad) out dtype
    x = x_ref[...].astype(w1_ref.dtype)                     # in-kernel cast (VPU)
    h = jnp.dot(x, w1_ref[...], preferred_element_type=jnp.float32)   # MXU, f32 acc
    h = h.astype(b1_ref.dtype) + b1_ref[...]                # bias add (VPU)
    h = jnp.tanh(h)                                         # tanh (EUP)
    out = jnp.dot(h.astype(w2_ref.dtype), w2_ref[...],
                  preferred_element_type=jnp.float32)       # MXU, f32 acc
    out = out + b2_ref[...]                                 # final bias in f32
    o_ref[...] = out.astype(o_ref.dtype)


def _chip_defaults():
    """(tm_max, vmem_cap_bytes, epilogue_dtype) per TPU generation."""
    kind = ""
    try:
        dev = jax.devices()[0]
        if dev.platform == "tpu":
            kind = dev.device_kind.lower()
    except Exception:
        pass
    if "v7" in kind or "7x" in kind:
        # 64 MiB VMEM per TensorCore: leave headroom for compiler scratch.
        return 512, 48 * 1024 * 1024, jnp.bfloat16
    if "v6" in kind:
        return 1024, 96 * 1024 * 1024, jnp.bfloat16
    if "v5 lite" in kind or "v5e" in kind or "v5lite" in kind:
        return 1024, 96 * 1024 * 1024, jnp.float32          # v5e: no bf16 VPU/EUP
    return 512, 64 * 1024 * 1024, jnp.float32               # unknown / v4 / v5p


def prepare_mvp_head_params(w1, b1, w2, b2, *, matmul_dtype=jnp.bfloat16,
                            epilogue_dtype=None):
    """One-time weight prep, hoisted out of the per-call hot path.

    Weights use the (in, out) layout so both matmuls are x @ W.  num_classes
    is zero-padded to a multiple of 128 lanes -> unmasked lane-dense stores
    and a full MXU column tile; the wrapper slices the real classes back out.
    """
    if epilogue_dtype is None:
        _, _, epilogue_dtype = _chip_defaults()
    input_dim, inner_dim = w1.shape
    inner_dim2, num_classes = w2.shape
    assert inner_dim == inner_dim2
    c_pad = _round_up(num_classes, 128)
    return dict(
        w1=w1.astype(matmul_dtype),
        b1=b1.reshape(1, inner_dim).astype(epilogue_dtype),
        w2=jnp.pad(w2, ((0, 0), (0, c_pad - num_classes))).astype(matmul_dtype),
        b2=jnp.pad(b2, (0, c_pad - num_classes)).reshape(1, c_pad).astype(jnp.float32),
        num_classes=num_classes,
    )


def _vmem_estimate(tm, d_in, d_inner, c_pad, x_item, out_item, mm_item, epi_item):
    x_tiles = 2 * tm * d_in * x_item            # streamed x, double-buffered
    x_cast = tm * d_in * mm_item                # in-kernel matmul-dtype copy of x
    out_tiles = 2 * tm * c_pad * out_item       # streamed out, double-buffered
    weights = 2 * (d_in * d_inner + d_inner * c_pad) * mm_item  # assume 2 buffers
    biases = 2 * (d_inner * epi_item + c_pad * 4)
    h_scratch = tm * d_inner * (4 + epi_item + mm_item)  # f32 acc + epi + mm copies
    return x_tiles + x_cast + out_tiles + weights + biases + h_scratch


def mvp_classification_head(hidden_states, params, *, tm_max=None, vmem_cap=None):
    """hidden_states: (..., input_dim) -> (..., num_classes).  Dropout = identity."""
    *lead, input_dim = hidden_states.shape
    w1, b1, w2, b2 = params["w1"], params["b1"], params["w2"], params["b2"]
    num_classes = params["num_classes"]
    inner_dim = w1.shape[1]
    c_pad = w2.shape[1]
    out_dtype = hidden_states.dtype

    default_tm, default_cap, _ = _chip_defaults()
    tm_max = default_tm if tm_max is None else tm_max
    vmem_cap = default_cap if vmem_cap is None else vmem_cap

    m = math.prod(lead) if lead else 1
    x2d = hidden_states.reshape(m, input_dim)

    x_item = jnp.dtype(x2d.dtype).itemsize
    out_item = jnp.dtype(out_dtype).itemsize
    mm_item = jnp.dtype(w1.dtype).itemsize
    epi_item = jnp.dtype(b1.dtype).itemsize

    # Row tile: multiple of 16 (bf16 sublane packing); shrink while the VMEM
    # footprint (incl. h scratch + double-buffered weights) exceeds ~2/3 cap.
    tm = min(tm_max, _round_up(max(m, 16), 16))
    while tm > 64 and 3 * _vmem_estimate(tm, input_dim, inner_dim, c_pad,
                                         x_item, out_item, mm_item,
                                         epi_item) > 2 * vmem_cap:
        tm //= 2

    # No row padding for the common m >= tm case: Pallas masks the ragged last
    # block.  Tiny inputs (m < tm) are padded so block dims stay <= array dims.
    m_eff = m
    if m < tm:
        x2d = jnp.pad(x2d, ((0, tm - m), (0, 0)))
        m_eff = tm

    grid = (pl.cdiv(m_eff, tm),)
    est = _vmem_estimate(tm, input_dim, inner_dim, c_pad,
                         x_item, out_item, mm_item, epi_item)
    vmem_budget = int(min(vmem_cap, max(32 * 1024 * 1024, (3 * est) // 2)))

    out2d = pl.pallas_call(
        _mvp_cls_head_kernel,
        out_shape=jax.ShapeDtypeStruct((m_eff, c_pad), out_dtype),
        grid=grid,
        in_specs=[
            pl.BlockSpec((tm, input_dim), lambda i: (i, 0)),         # x (streamed)
            pl.BlockSpec((input_dim, inner_dim), lambda i: (0, 0)),  # w1 (resident)
            pl.BlockSpec((1, inner_dim), lambda i: (0, 0)),          # b1 (resident)
            pl.BlockSpec((inner_dim, c_pad), lambda i: (0, 0)),      # w2 (resident)
            pl.BlockSpec((1, c_pad), lambda i: (0, 0)),              # b2 (resident)
        ],
        out_specs=pl.BlockSpec((tm, c_pad), lambda i: (i, 0)),
        compiler_params=pltpu.CompilerParams(
            dimension_semantics=("parallel",),   # M axis is embarrassingly parallel
            vmem_limit_bytes=vmem_budget,
        ),
    )(x2d, w1, b1, w2, b2)

    out2d = out2d[:m, :num_classes]
    return out2d.reshape(*lead, num_classes)


def init_params(key, input_dim, inner_dim, num_classes, dtype=jnp.float32):
    """Deterministic synthetic init mirroring nn.Linear shapes (stored (in, out))."""
    k1, k2, k3, k4 = jax.random.split(key, 4)
    bound1 = 1.0 / (input_dim ** 0.5)
    bound2 = 1.0 / (inner_dim ** 0.5)
    w1 = jax.random.uniform(k1, (input_dim, inner_dim), dtype, -bound1, bound1)
    b1 = jax.random.uniform(k2, (inner_dim,), dtype, -bound1, bound1)
    w2 = jax.random.uniform(k3, (inner_dim, num_classes), dtype, -bound2, bound2)
    b2 = jax.random.uniform(k4, (num_classes,), dtype, -bound2, bound2)
    return w1, b1, w2, b2


if __name__ == "__main__":
    batch, seq, input_dim, inner_dim, num_classes = 2, 8, 32, 32, 4

    key = jax.random.PRNGKey(0)
    k_x, k_p = jax.random.split(key)
    hidden_states = jax.random.normal(k_x, (batch, seq, input_dim), jnp.float32)
    w1, b1, w2, b2 = init_params(k_p, input_dim, inner_dim, num_classes)

    # One-time weight prep (bf16 casts + lane padding), outside the hot path.
    params = prepare_mvp_head_params(w1, b1, w2, b2)

    out = mvp_classification_head(hidden_states, params)
    out = jax.block_until_ready(out)

    # Pure-JAX f32 reference (dropout is identity at inference).  The kernel
    # runs bf16 matmuls with f32 accumulation and, on v6e/v7x, a bf16
    # bias+tanh epilogue, hence the loose tolerance.
    ref = jnp.tanh(hidden_states @ w1 + b1) @ w2 + b2
    assert out.shape == (batch, seq, num_classes), out.shape
    assert jnp.allclose(out, ref, atol=5e-2, rtol=5e-2), (
        float(jnp.max(jnp.abs(out - ref))))

    print("KERNEL_OK")
</pallas_src>

<mosaic_0001>
module attributes {stable_mosaic.version = 11 : i64} {
  func.func @_mvp_cls_head_kernel(%arg0: i32, %arg1: memref<16x32xf32, #tpu.memory_space<vmem>>, %arg2: memref<32x32xbf16, #tpu.memory_space<vmem>>, %arg3: memref<1x32xf32, #tpu.memory_space<vmem>>, %arg4: memref<32x128xbf16, #tpu.memory_space<vmem>>, %arg5: memref<1x128xf32, #tpu.memory_space<vmem>>, %arg6: memref<16x128xf32, #tpu.memory_space<vmem>>) attributes {dimension_semantics = [#tpu.dimension_semantics<parallel>], iteration_bounds = array<i64: 1>, scalar_prefetch = 0 : i64, scratch_operands = 0 : i64, tpu.core_type = #tpu.core_type<tc>, window_params = [{transform_indices = @transform_0, window_bounds = array<i64: 16, 32>}, {pipeline_mode = #tpu.pipeline_mode<synchronous>, transform_indices = @transform_1, window_bounds = array<i64: 32, 32>}, {pipeline_mode = #tpu.pipeline_mode<synchronous>, transform_indices = @transform_2, window_bounds = array<i64: 1, 32>}, {pipeline_mode = #tpu.pipeline_mode<synchronous>, transform_indices = @transform_3, window_bounds = array<i64: 32, 128>}, {pipeline_mode = #tpu.pipeline_mode<synchronous>, transform_indices = @transform_4, window_bounds = array<i64: 1, 128>}, {transform_indices = @transform_5, window_bounds = array<i64: 16, 128>}]} {
    %c0 = arith.constant 0 : index
    %c0_0 = arith.constant 0 : index
    %0 = vector.load %arg1[%c0, %c0_0] : memref<16x32xf32, #tpu.memory_space<vmem>>, vector<16x32xf32>
    %1 = arith.truncf %0 : vector<16x32xf32> to vector<16x32xbf16>
    %c0_1 = arith.constant 0 : index
    %c0_2 = arith.constant 0 : index
    %2 = vector.load %arg2[%c0_1, %c0_2] : memref<32x32xbf16, #tpu.memory_space<vmem>>, vector<32x32xbf16>
    %cst = arith.constant dense<0.000000e+00> : vector<16x32xf32>
    %3 = tpu.matmul %1, %2, %cst {dimension_numbers = #tpu.dot_dimension_numbers<[1], [0], [0], [1], [0, 0, 1, 1], [], []>} : vector<16x32xbf16>, vector<32x32xbf16>, vector<16x32xf32> -> vector<16x32xf32>
    %c0_3 = arith.constant 0 : index
    %c0_4 = arith.constant 0 : index
    %4 = vector.load %arg3[%c0_3, %c0_4] : memref<1x32xf32, #tpu.memory_space<vmem>>, vector<1x32xf32>
    %5 = vector.broadcast %4 : vector<1x32xf32> to vector<16x32xf32>
    %6 = arith.addf %3, %5 : vector<16x32xf32>
    %7 = math.tanh %6 : vector<16x32xf32>
    %8 = arith.truncf %7 : vector<16x32xf32> to vector<16x32xbf16>
    %c0_5 = arith.constant 0 : index
    %c0_6 = arith.constant 0 : index
    %9 = vector.load %arg4[%c0_5, %c0_6] : memref<32x128xbf16, #tpu.memory_space<vmem>>, vector<32x128xbf16>
    %cst_7 = arith.constant dense<0.000000e+00> : vector<16x128xf32>
    %10 = tpu.matmul %8, %9, %cst_7 {dimension_numbers = #tpu.dot_dimension_numbers<[1], [0], [0], [1], [0, 0, 1, 1], [], []>} : vector<16x32xbf16>, vector<32x128xbf16>, vector<16x128xf32> -> vector<16x128xf32>
    %c0_8 = arith.constant 0 : index
    %c0_9 = arith.constant 0 : index
    %11 = vector.load %arg5[%c0_8, %c0_9] : memref<1x128xf32, #tpu.memory_space<vmem>>, vector<1x128xf32>
    %12 = vector.broadcast %11 : vector<1x128xf32> to vector<16x128xf32>
    %13 = arith.addf %10, %12 : vector<16x128xf32>
    %c0_10 = arith.constant 0 : index
    %c0_11 = arith.constant 0 : index
    %14 = vector.load %arg6[%c0_10, %c0_11] : memref<16x128xf32, #tpu.memory_space<vmem>>, vector<16x128xf32>
    tpu.vector_store %arg6[%c0_10, %c0_11], %13 {strides = array<i32>} : memref<16x128xf32, #tpu.memory_space<vmem>>, vector<16x128xf32>,
    return
  }
  func.func @transform_0(%arg0: i32) -> (i32, i32) {
    %c0_i32 = arith.constant 0 : i32
    %c0_i32_0 = arith.constant 0 : i32
    return %arg0, %c0_i32 : i32, i32
  }
  func.func @transform_1(%arg0: i32) -> (i32, i32) {
    %c0_i32 = arith.constant 0 : i32
    %c0_i32_0 = arith.constant 0 : i32
    %c0_i32_1 = arith.constant 0 : i32
    return %c0_i32, %c0_i32_0 : i32, i32
  }
  func.func @transform_2(%arg0: i32) -> (i32, i32) {
    %c0_i32 = arith.constant 0 : i32
    %c0_i32_0 = arith.constant 0 : i32
    %c0_i32_1 = arith.constant 0 : i32
    return %c0_i32, %c0_i32_0 : i32, i32
  }
  func.func @transform_3(%arg0: i32) -> (i32, i32) {
    %c0_i32 = arith.constant 0 : i32
    %c0_i32_0 = arith.constant 0 : i32
    %c0_i32_1 = arith.constant 0 : i32
    return %c0_i32, %c0_i32_0 : i32, i32
  }
  func.func @transform_4(%arg0: i32) -> (i32, i32) {
    %c0_i32 = arith.constant 0 : i32
    %c0_i32_0 = arith.constant 0 : i32
    %c0_i32_1 = arith.constant 0 : i32
    return %c0_i32, %c0_i32_0 : i32, i32
  }
  func.func @transform_5(%arg0: i32) -> (i32, i32) {
    %c0_i32 = arith.constant 0 : i32
    %c0_i32_0 = arith.constant 0 : i32
    return %arg0, %c0_i32 : i32, i32
  }
}

</mosaic_0001>

<llo_original>
// kernel: tpu_custom_call.1
$region0: #{tpu_custom_call.1}
  #allocation0 [shape = 'u32[]', space=smem, size = 0x4, offset = 0x4, fixed_abs, tag = 'smem constant byte address 0x4 - core index']
  #allocation1 [shape = 'u32[144,128]{1,0:T(1,128)}', space=vmem, size = 0x12000, scoped, tag = 'internal scratch']
  %s0 = inlined_call_operand.hbm [shape: f32[16,32], index: 0, kind: input, shape index: {}]
  %s1 = inlined_call_operand.hbm [shape: bf16[32,32], index: 1, kind: input, shape index: {}]
  %s2 = inlined_call_operand.vmem [shape: f32[1,32], index: 2, kind: input, shape index: {}]
  %s3 = inlined_call_operand.hbm [shape: bf16[32,128], index: 3, kind: input, shape index: {}]
  %s4 = inlined_call_operand.vmem [shape: f32[1,128], index: 4, kind: input, shape index: {}]
  %s5 = inlined_call_operand.hbm [shape: f32[16,128], index: 5, kind: output, shape index: {}]
  %s6 = sld [smem:[#allocation0]]
  $region42: #{tpu_custom_call.1} parent=0
    _
  %s8 = ssub.s32 1, %s6
  %s9 = scalar_select 0, %s8, %s6
  $region1: #{tpu_custom_call.1} parent=0
    #allocation2 [shape = 'u8[8192]{0}', space=vmem, size = 0x2000, scoped, tag = 'input window, operand 0, single buffered']
    #allocation3 [shape = 's32[1]{0}', space=sflag, size = 0x4, scoped, tag = 'scoped memory for tpu_custom_call.1']
    #allocation4 [shape = 's32[1]{0}', space=sflag, size = 0x4, scoped, tag = 'scoped memory for tpu_custom_call.1']
    #allocation5 [shape = 'u8[8192]{0}', space=vmem, size = 0x2000, scoped, tag = 'input window, operand 1, single buffered']
    #allocation6 [shape = 's32[1]{0}', space=sflag, size = 0x4, scoped, tag = 'scoped memory for tpu_custom_call.1']
    #allocation7 [shape = 'u8[8192]{0}', space=vmem, size = 0x2000, scoped, tag = 'input window, operand 3, single buffered']
    #allocation8 [shape = 'u8[8192]{0}', space=vmem, size = 0x2000, scoped, tag = 'output window, operand 0, single buffered']
    %10 = vsyncpa [#allocation3], 0
    %11 = vsyncpa [#allocation6], 0
    %12 = vsyncpa [#allocation4], 0
    // Predicated region
    $region2: #{tpu_custom_call.1} parent=1 // pred_check
      _
    $region3: #{tpu_custom_call.1} parent=1 // pred_check_branch
      %14 = sbr.rel (0) target = $region5
    $region4: #{tpu_custom_call.1} parent=1 // pred_region
      %s16 = ssub.s32 256, 256
      %17 = vsyncadd [#allocation3], %s16
      %s18 = sshll.u32 [#allocation2], 4
      %s19 = int_to_ptr.vmem [resolvable:$true] %s18
      %24 = dma.hbm_to_vmem [thread:$0]  %s0, 256, %s19, [#allocation3], 128, 128, 8
    $region5: #{tpu_custom_call.1} parent=1 // pred_fallthru
      _
    // Predicated region
    $region6: #{tpu_custom_call.1} parent=1 // pred_check
      _
    $region7: #{tpu_custom_call.1} parent=1 // pred_check_branch
      %26 = sbr.rel (0) target = $region9
    $region8: #{tpu_custom_call.1} parent=1 // pred_region
      %s28 = ssub.s32 256, 256
      %29 = vsyncadd [#allocation6], %s28
      %s30 = sshll.u32 [#allocation5], 4
      %s31 = int_to_ptr.vmem [resolvable:$true] %s30
      %36 = dma.hbm_to_vmem [thread:$0]  %s1, 256, %s31, [#allocation6], 64, 64, 4
    $region9: #{tpu_custom_call.1} parent=1 // pred_fallthru
      _
    // Predicated region
    $region10: #{tpu_custom_call.1} parent=1 // pred_check
      _
    $region11: #{tpu_custom_call.1} parent=1 // pred_check_branch
      %38 = sbr.rel (0) target = $region13
    $region12: #{tpu_custom_call.1} parent=1 // pred_region
      _
    $region13: #{tpu_custom_call.1} parent=1 // pred_fallthru
      _
    // Predicated region
    $region14: #{tpu_custom_call.1} parent=1 // pred_check
      _
    $region15: #{tpu_custom_call.1} parent=1 // pred_check_branch
      %40 = sbr.rel (0) target = $region17
    $region16: #{tpu_custom_call.1} parent=1 // pred_region
      %s42 = ssub.s32 256, 256
      %43 = vsyncadd [#allocation6], %s42
      %s44 = sshll.u32 [#allocation7], 4
      %s45 = int_to_ptr.vmem [resolvable:$true] %s44
      %50 = dma.hbm_to_vmem [thread:$0]  %s3, 256, %s45, [#allocation6], 64, 64, 4
    $region17: #{tpu_custom_call.1} parent=1 // pred_fallthru
      _
    // Predicated region
    $region18: #{tpu_custom_call.1} parent=1 // pred_check
      _
    $region19: #{tpu_custom_call.1} parent=1 // pred_check_branch
      %52 = sbr.rel (0) target = $region21
    $region20: #{tpu_custom_call.1} parent=1 // pred_region
      _
    $region21: #{tpu_custom_call.1} parent=1 // pred_fallthru
      _
    // Predicated region
    $region22: #{tpu_custom_call.1} parent=1 // pred_check
      _
    $region23: #{tpu_custom_call.1} parent=1 // pred_check_branch
      %54 = sbr.rel (0) target = $region25
    $region24: #{tpu_custom_call.1} parent=1 // pred_region
      %55 = dma.done [#allocation3], 256
    $region25: #{tpu_custom_call.1} parent=1 // pred_fallthru
      _
    // Predicated region
    $region26: #{tpu_custom_call.1} parent=1 // pred_check
      _
    $region27: #{tpu_custom_call.1} parent=1 // pred_check_branch
      %57 = sbr.rel (0) target = $region29
    $region28: #{tpu_custom_call.1} parent=1 // pred_region
      %58 = dma.done [#allocation6], 256
    $region29: #{tpu_custom_call.1} parent=1 // pred_fallthru
      _
    // Predicated region
    $region30: #{tpu_custom_call.1} parent=1 // pred_check
      _
    $region31: #{tpu_custom_call.1} parent=1 // pred_check_branch
      %60 = sbr.rel (0) target = $region33
    $region32: #{tpu_custom_call.1} parent=1 // pred_region
      %61 = dma.done [#allocation6], 256
    $region33: #{tpu_custom_call.1} parent=1 // pred_fallthru
      _
    %v63 = vld [vmem:[#allocation2] sm:$0xff]
    %v64 = vld [vmem:[#allocation2 + $0x8] sm:$0xff]
    %v65 = vpack.c.bf16 %v64, %v63
    %v66 = vld [vmem:[#allocation5] sm:$0xf]
    %v67 = vld [vmem:[#allocation5 + $0x4] sm:$0xf]
    %v68 = vld [vmem:[#allocation5 + $0x8] sm:$0xf]
    %v69 = vld [vmem:[#allocation5 + $0xc] sm:$0xf]
    %v70 = vld [vmem:[%s2] sm:$0x1]
    %v72 = vlaneseq
    %v73 = vshrl.u32 %v72, 7
    %v74 = vsub.s32 0, %v73
    %v75 = vrot.slane %v70, %v74
    %v81 = vunpack.c.l.b16 %v66
    %v82 = vunpack.c.l.b16 %v67
    %v83 = vunpack.c.l.b16 %v68
    %v84 = vunpack.c.l.b16 %v69
    %v85 = vpack.c.b16 %v82, %v81
    %v86 = vpack.c.b16 %v84, %v83
    %vm89 = vcmask 261120
    %v91 = vsel %vm89, %v65, 0
    %93 = vmatprep.subr.bf16.mxu0 0
    %94 = vmatpush1.bf16.msra.mxu0 %v85
    %95 = vmatprep.subr.bf16.mxu0 0
    %96 = vmatpush1.bf16.msra.mxu0 %v86
    %97 = vmatprep.subr.bf16.mxu0 0
    %98 = vmatpush1.bf16.msra.mxu0 0
    %99 = vmatprep.subr.bf16.mxu0 0
    %100 = vmatpush1.bf16.msra.mxu0 0
    %101 = vmatprep.subr.bf16.mxu0 0
    %102 = vmatpush1.bf16.msra.mxu0 0
    %103 = vmatprep.subr.bf16.mxu0 0
    %104 = vmatpush1.bf16.msra.mxu0 0
    %105 = vmatprep.subr.bf16.mxu0 0
    %106 = vmatpush1.bf16.msra.mxu0 0
    %107 = vmatprep.subr.bf16.mxu0 0
    %108 = vmatpush1.bf16.msra.mxu0 0
    %109 = vmatprep.subr.bf16.mxu0 0
    %110 = vmatpush1.bf16.msra.mxu0 0
    %111 = vmatprep.subr.bf16.mxu0 0
    %112 = vmatpush1.bf16.msra.mxu0 0
    %113 = vmatprep.subr.bf16.mxu0 0
    %114 = vmatpush1.bf16.msra.mxu0 0
    %115 = vmatprep.subr.bf16.mxu0 0
    %116 = vmatpush1.bf16.msra.mxu0 0
    %117 = vmatprep.subr.bf16.mxu0 0
    %118 = vmatpush1.bf16.msra.mxu0 0
    %119 = vmatprep.subr.bf16.mxu0 0
    %120 = vmatpush1.bf16.msra.mxu0 0
    %121 = vmatprep.subr.bf16.mxu0 0
    %122 = vmatpush1.bf16.msra.mxu0 0
    %123 = vmatprep.subr.bf16.mxu0 0
    %124 = vmatpush1.bf16.msra.mxu0 0
    %125 = vmatprep.mubr.bf16.mxu0 0
    %126 = vmatmul.mubr.bf16.gmra.mrb[0].mxu0 %v91
    %v127 = vpop.f32.mrb[0].mxu0
    %v128 = vadd.f32 %v75, %v127
    %v129 = vpop.f32.mrb[0].mxu0
    %v130 = vpop.f32.mrb[0].mxu0
    %v131 = vadd.f32 %v75, %v130
    %v132 = vpop.f32.mrb[0].mxu0
    %133 = vdwg.mxu0
    %v134 = vtanh.pop %v128
    %v135 = vtanh.pop %v131
    %v136 = vpack.c.bf16 %v135, %v134
    %v137 = vld [vmem:[#allocation7] sm:$0xf]
    %v138 = vld [vmem:[#allocation7 + $0x4] sm:$0xf]
    %v139 = vld [vmem:[#allocation7 + $0x8] sm:$0xf]
    %v140 = vld [vmem:[#allocation7 + $0xc] sm:$0xf]
    %v141 = vld [vmem:[%s4] sm:$0x1]
    %v143 = vlaneseq
    %v144 = vshrl.u32 %v143, 7
    %v145 = vsub.s32 0, %v144
    %v146 = vrot.slane %v141, %v145
    %v152 = vunpack.c.l.b16 %v137
    %v153 = vunpack.c.l.b16 %v138
    %v154 = vunpack.c.l.b16 %v139
    %v155 = vunpack.c.l.b16 %v140
    %v156 = vpack.c.b16 %v153, %v152
    %v157 = vpack.c.b16 %v155, %v154
    %v161 = vsel %vm89, %v136, 0
    %163 = vmatprep.subr.bf16.mxu0 0
    %164 = vmatpush1.bf16.msra.mxu0 %v156
    %165 = vmatprep.subr.bf16.mxu0 0
    %166 = vmatpush1.bf16.msra.mxu0 %v157
    %167 = vmatprep.subr.bf16.mxu0 0
    %168 = vmatpush1.bf16.msra.mxu0 0
    %169 = vmatprep.subr.bf16.mxu0 0
    %170 = vmatpush1.bf16.msra.mxu0 0
    %171 = vmatprep.subr.bf16.mxu0 0
    %172 = vmatpush1.bf16.msra.mxu0 0
    %173 = vmatprep.subr.bf16.mxu0 0
    %174 = vmatpush1.bf16.msra.mxu0 0
    %175 = vmatprep.subr.bf16.mxu0 0
    %176 = vmatpush1.bf16.msra.mxu0 0
    %177 = vmatprep.subr.bf16.mxu0 0
    %178 = vmatpush1.bf16.msra.mxu0 0
    %179 = vmatprep.subr.bf16.mxu0 0
    %180 = vmatpush1.bf16.msra.mxu0 0
    %181 = vmatprep.subr.bf16.mxu0 0
    %182 = vmatpush1.bf16.msra.mxu0 0
    %183 = vmatprep.subr.bf16.mxu0 0
    %184 = vmatpush1.bf16.msra.mxu0 0
    %185 = vmatprep.subr.bf16.mxu0 0
    %186 = vmatpush1.bf16.msra.mxu0 0
    %187 = vmatprep.subr.bf16.mxu0 0
    %188 = vmatpush1.bf16.msra.mxu0 0
    %189 = vmatprep.subr.bf16.mxu0 0
    %190 = vmatpush1.bf16.msra.mxu0 0
    %191 = vmatprep.subr.bf16.mxu0 0
    %192 = vmatpush1.bf16.msra.mxu0 0
    %193 = vmatprep.subr.bf16.mxu0 0
    %194 = vmatpush1.bf16.msra.mxu0 0
    %195 = vmatprep.mubr.bf16.mxu0 0
    %196 = vmatmul.mubr.bf16.gmra.mrb[0].mxu0 %v161
    %v197 = vpop.f32.mrb[0].mxu0
    %v198 = vadd.f32 %v146, %v197
    %v199 = vpop.f32.mrb[0].mxu0
    %v200 = vpop.f32.mrb[0].mxu0
    %v201 = vadd.f32 %v146, %v200
    %v202 = vpop.f32.mrb[0].mxu0
    %203 = vdwg.mxu0
    %204 = vst [vmem:[#allocation8] sm:$0xff] %v198
    %205 = vst [vmem:[#allocation8 + $0x8] sm:$0xff] %v201
    // Predicated region
    $region34: #{tpu_custom_call.1} parent=1 // pred_check
      _
    $region35: #{tpu_custom_call.1} parent=1 // pred_check_branch
      %207 = sbr.rel (0) target = $region37
    $region36: #{tpu_custom_call.1} parent=1 // pred_region
      %s209 = ssub.s32 256, 256
      %210 = vsyncadd [#allocation4], %s209
      %s211 = sshll.u32 [#allocation8], 4
      %s212 = int_to_ptr.vmem [resolvable:$true] %s211
      %217 = dma.vmem_to_hbm [thread:$0]  %s212, 256, %s5, [#allocation4], 128, 128, 8
    $region37: #{tpu_custom_call.1} parent=1 // pred_fallthru
      _
    // Predicated region
    $region38: #{tpu_custom_call.1} parent=1 // pred_check
      _
    $region39: #{tpu_custom_call.1} parent=1 // pred_check_branch
      %219 = sbr.rel (0) target = $region41
    $region40: #{tpu_custom_call.1} parent=1 // pred_region
      %220 = dma.done [#allocation4], 256
    $region41: #{tpu_custom_call.1} parent=1 // pred_fallthru
      _
    %221 = vsyncpa [#allocation3], 1
    %222 = vsyncpa [#allocation6], 1
    %223 = vsyncpa [#allocation4], 1

</llo_original>
